<compile_context>
chip_gen: v7x
topology: tpu7x:2x2x1
jax: 0.10.0
libtpu: 0.0.40
codegen_flags: <defaults>
</compile_context>

<pallas_src>
import functools

import jax
import jax.numpy as jnp
from jax.experimental import pallas as pl
from jax.experimental.pallas import tpu as pltpu


# ----------------------------- config (ModelConfig) -----------------------------
EMBEDDING_DIM = 32
EXPERT_INTER_DIM = 64
INTER_DIM = 64          # shared-expert (FFN) inter dim
N_EXPERTS = 4
ACTIVE_EXPERTS = 2
FFN_BIAS = False        # conf.ffn_bias = False (no biases in any Linear)
BATCH = 2
SEQ = 8


def _round_up(x, m):
    return ((x + m - 1) // m) * m


# --------------------------------- Pallas kernel --------------------------------
def _moe_kernel(x_ref, gate_ref, wup_ref, sel_ref, shared_ref, wdown_ref, o_ref,
                *, n_experts, top_k, hidden_total):
    x = x_ref[...]
    x_f32 = x.astype(jnp.float32)
    x_bf = x.astype(jnp.bfloat16)

    # --- router (kept in f32: cheap, avoids bf16 tie flips in top-k) ---
    logits = jnp.dot(x_f32, gate_ref[...], preferred_element_type=jnp.float32)  # (TN, E)
    logits = logits - jnp.max(logits, axis=-1, keepdims=True)
    e = jnp.exp(logits)
    denom_inv = pl.reciprocal(jnp.sum(e, axis=-1, keepdims=True), approx=True)
    scores = e * denom_inv                                                      # (TN, E)
    # TODO(synk): training-time gating noise (randn) and dropout omitted (eval mode).

    # rank-count top-k mask: expert i active iff fewer than top_k scores beat it.
    ranks = jnp.zeros_like(scores)
    for j in range(n_experts):                       # static unroll, E is tiny
        ranks = ranks + (scores[:, j:j + 1] > scores).astype(jnp.float32)
    weights = jnp.where(ranks < top_k, scores, 0.0)                             # (TN, E)

    # --- fused up-projection: [W1_all | SW1 | W2_all | SW2], one bf16 matmul ---
    h12 = jnp.dot(x_bf, wup_ref[...], preferred_element_type=jnp.float32)       # (TN, 2*Htot)
    h1 = h12[:, :hidden_total]
    h2 = h12[:, hidden_total:]
    # SwiGLU with a single EUP transcendental: sigmoid(x) = 0.5*tanh(0.5*x)+0.5
    h = (h1 * (0.5 * jnp.tanh(0.5 * h1) + 0.5)) * h2                            # (TN, Htot)

    # --- broadcast gate weights across each expert's hidden block ---
    # g[:, i*H:(i+1)*H] = weights[:, i]; shared-expert/pad block gets +1 from the
    # precomputed mask (no runtime iota / compare / cast).
    g = jnp.dot(weights.astype(jnp.bfloat16), sel_ref[...],
                preferred_element_type=jnp.float32)                             # (TN, Htot)
    g = g + shared_ref[...]                                                     # (1, Htot) bcast

    # --- fused down-projection: routed experts + shared expert in one matmul ---
    out = jnp.dot((h * g).astype(jnp.bfloat16), wdown_ref[...],
                  preferred_element_type=jnp.float32)                           # (TN, C)
    o_ref[...] = out.astype(o_ref.dtype)


# --------------------------- one-time weight packing -----------------------------
def pack_params(params):
    """Model-load-time packing (runs once, NOT inside the jitted forward)."""
    gate = params["gate"]
    w1, w2, wp = params["w1"], params["w2"], params["wp"]          # (E,C,H),(E,C,H),(E,H,C)
    sw1, sw2, swp = params["sw1"], params["sw2"], params["swp"]    # (C,Hs),(C,Hs),(Hs,C)
    E, C, H = w1.shape
    Hs = sw1.shape[1]

    # Pad the shared hidden so Htot is a multiple of 128 (lane-aligned h1/h2 split).
    Htot = _round_up(E * H + Hs, 128)
    HsP = Htot - E * H
    assert HsP >= Hs

    # Fused up-projection weight: [W1_all | SW1_pad | W2_all | SW2_pad] -> (C, 2*Htot)
    w1_all = jnp.transpose(w1, (1, 0, 2)).reshape(C, E * H)
    w2_all = jnp.transpose(w2, (1, 0, 2)).reshape(C, E * H)
    sw1_p = jnp.pad(sw1, ((0, 0), (0, HsP - Hs)))
    sw2_p = jnp.pad(sw2, ((0, 0), (0, HsP - Hs)))
    w_up = jnp.concatenate([w1_all, sw1_p, w2_all, sw2_p], axis=1).astype(jnp.bfloat16)

    # Fused down-projection weight: [wp_0; ...; wp_{E-1}; swp_pad] -> (Htot, C)
    wp_all = wp.reshape(E * H, C)
    swp_p = jnp.pad(swp, ((0, HsP - Hs), (0, 0)))
    w_down = jnp.concatenate([wp_all, swp_p], axis=0).astype(jnp.bfloat16)

    # Selector: S[i, i*H:(i+1)*H] = 1, zero elsewhere (incl. shared/pad block). bf16 (exact 0/1).
    sel = jnp.repeat(jnp.eye(E, dtype=jnp.float32), H, axis=1)
    sel = jnp.pad(sel, ((0, 0), (0, HsP))).astype(jnp.bfloat16)                 # (E, Htot)

    # Precomputed shared-expert "always on" mask (covers shared + pad columns).
    lane = jnp.arange(Htot)
    shared_mask = (lane >= E * H).astype(jnp.float32)[None, :]                  # (1, Htot)

    # Correctness invariant: padded columns of w_up / rows of w_down are exactly zero,
    # so the pad block contributes nothing even though shared_mask sets g=1 there.
    assert bool(jnp.all(w_up[:, E * H + Hs:Htot] == 0))
    assert bool(jnp.all(w_up[:, Htot + E * H + Hs:] == 0))
    assert bool(jnp.all(w_down[E * H + Hs:Htot, :] == 0))

    return {
        "gate": gate.astype(jnp.float32),   # (C, E)
        "w_up": w_up,                       # (C, 2*Htot) bf16
        "sel": sel,                         # (E, Htot)   bf16
        "shared_mask": shared_mask,         # (1, Htot)   f32
        "w_down": w_down,                   # (Htot, C)   bf16
    }


# ------------------------------------ wrapper ------------------------------------
@functools.partial(jax.jit, static_argnames=("top_k",))
def moe_forward(x, packed, *, top_k):
    B, T, C = x.shape
    N = B * T
    xf = x.reshape(N, C)

    gate_w = packed["gate"]
    w_up = packed["w_up"]
    sel = packed["sel"]
    shared = packed["shared_mask"]
    w_down = packed["w_down"]
    E = gate_w.shape[1]
    Htot = w_down.shape[0]

    # Token tiling: only split when each tile keeps >=128 rows (per review: the
    # per-grid-step overhead dominates at small tiles, and the 2-way split only
    # helps on v7x's 2 TensorCores).
    if N % 2 == 0 and (N // 2) >= 128 and (N // 2) % 8 == 0:
        tn = N // 2
    else:
        tn = N
    grid = (N // tn,)

    def resident(arr):
        # Constant-index-map, single-buffered resident weight (no double-buffer VMEM).
        zeros = (0,) * arr.ndim
        return pl.BlockSpec(arr.shape, lambda i, _z=zeros: _z,
                            pipeline_mode=pl.Buffered(1))

    kernel = functools.partial(_moe_kernel, n_experts=E, top_k=top_k,
                               hidden_total=Htot)
    out = pl.pallas_call(
        kernel,
        out_shape=jax.ShapeDtypeStruct((N, C), x.dtype),
        grid_spec=pltpu.PrefetchScalarGridSpec(
            num_scalar_prefetch=0,
            grid=grid,
            in_specs=[
                pl.BlockSpec((tn, C), lambda i: (i, 0)),    # x tokens (pipelined)
                resident(gate_w),                           # (C, E)
                resident(w_up),                             # (C, 2*Htot)
                resident(sel),                              # (E, Htot)
                resident(shared),                           # (1, Htot)
                resident(w_down),                           # (Htot, C)
            ],
            out_specs=pl.BlockSpec((tn, C), lambda i: (i, 0)),
        ),
        compiler_params=pltpu.CompilerParams(
            dimension_semantics=("parallel",),
            vmem_limit_bytes=32 * 1024 * 1024),
    )(xf, gate_w, w_up, sel, shared, w_down)
    return out.reshape(B, T, C)


# --------------------------- pure-JAX reference (check) ---------------------------
def moe_reference(x, params, *, top_k, matmul_dtype=jnp.bfloat16):
    """Mirrors the kernel's numerics: f32 router, bf16 expert matmuls (f32 accum)."""
    B, T, C = x.shape
    xf = x.reshape(-1, C).astype(jnp.float32)

    def mm(a, w):
        return jnp.dot(a.astype(matmul_dtype), w.astype(matmul_dtype),
                       preferred_element_type=jnp.float32)

    scores = jax.nn.softmax(xf @ params["gate"], axis=-1)
    _, idx = jax.lax.top_k(scores, top_k)
    mask = jnp.sum(jax.nn.one_hot(idx, scores.shape[-1], dtype=jnp.float32), axis=1)
    wts = scores * mask
    y = jnp.zeros_like(xf)
    for i in range(scores.shape[-1]):
        h = jax.nn.silu(mm(xf, params["w1"][i])) * mm(xf, params["w2"][i])
        y = y + wts[:, i:i + 1] * mm(h, params["wp"][i])
    z = mm(jax.nn.silu(mm(xf, params["sw1"])) * mm(xf, params["sw2"]), params["swp"])
    return (y + z).reshape(B, T, C)


# --------------------------------- param init ------------------------------------
def init_params(key):
    C, H, Hs, E = EMBEDDING_DIM, EXPERT_INTER_DIM, INTER_DIM, N_EXPERTS
    keys = jax.random.split(key, 7)

    def lin(k, fan_in, shape):                    # torch-style U(-1/sqrt(fan_in), ...)
        bound = 1.0 / (fan_in ** 0.5)
        return jax.random.uniform(k, shape, jnp.float32, -bound, bound)

    return {
        "gate": lin(keys[0], C, (C, E)),
        "w1":   lin(keys[1], C, (E, C, H)),
        "w2":   lin(keys[2], C, (E, C, H)),
        "wp":   lin(keys[3], H, (E, H, C)),
        "sw1":  lin(keys[4], C, (C, Hs)),
        "sw2":  lin(keys[5], C, (C, Hs)),
        "swp":  lin(keys[6], Hs, (Hs, C)),
    }


if __name__ == "__main__":
    key = jax.random.PRNGKey(0)
    kx, kp = jax.random.split(key)
    x = jax.random.normal(kx, (BATCH, SEQ, EMBEDDING_DIM), jnp.float32)
    params = init_params(kp)

    packed = pack_params(params)   # one-time, model-load-time packing

    out = moe_forward(x, packed, top_k=ACTIVE_EXPERTS)
    out = jax.block_until_ready(out)

    ref = moe_reference(x, params, top_k=ACTIVE_EXPERTS)
    assert out.shape == (BATCH, SEQ, EMBEDDING_DIM)
    assert jnp.allclose(out, ref, rtol=2e-2, atol=2e-2), (
        "mismatch vs reference: max abs diff = %s"
        % float(jnp.max(jnp.abs(out - ref))))

    print("KERNEL_OK")
</pallas_src>

<mosaic_0001>
module attributes {stable_mosaic.version = 11 : i64} {
  func.func @_moe_kernel(%arg0: i32, %arg1: memref<16x32xf32, #tpu.memory_space<vmem>>, %arg2: memref<32x4xf32, #tpu.memory_space<vmem>>, %arg3: memref<32x768xbf16, #tpu.memory_space<vmem>>, %arg4: memref<4x384xbf16, #tpu.memory_space<vmem>>, %arg5: memref<1x384xf32, #tpu.memory_space<vmem>>, %arg6: memref<384x32xbf16, #tpu.memory_space<vmem>>, %arg7: memref<16x32xf32, #tpu.memory_space<vmem>>) attributes {dimension_semantics = [#tpu.dimension_semantics<parallel>], iteration_bounds = array<i64: 1>, scalar_prefetch = 0 : i64, scratch_operands = 0 : i64, tpu.core_type = #tpu.core_type<tc>, window_params = [{transform_indices = @transform_0, window_bounds = array<i64: 16, 32>}, {pipeline_mode = #tpu.pipeline_mode<synchronous>, transform_indices = @transform_1, window_bounds = array<i64: 32, 4>}, {pipeline_mode = #tpu.pipeline_mode<synchronous>, transform_indices = @transform_2, window_bounds = array<i64: 32, 768>}, {pipeline_mode = #tpu.pipeline_mode<synchronous>, transform_indices = @transform_3, window_bounds = array<i64: 4, 384>}, {pipeline_mode = #tpu.pipeline_mode<synchronous>, transform_indices = @transform_4, window_bounds = array<i64: 1, 384>}, {pipeline_mode = #tpu.pipeline_mode<synchronous>, transform_indices = @transform_5, window_bounds = array<i64: 384, 32>}, {transform_indices = @transform_6, window_bounds = array<i64: 16, 32>}]} {
    %c0 = arith.constant 0 : index
    %c0_0 = arith.constant 0 : index
    %0 = vector.load %arg1[%c0, %c0_0] : memref<16x32xf32, #tpu.memory_space<vmem>>, vector<16x32xf32>
    %1 = arith.truncf %0 : vector<16x32xf32> to vector<16x32xbf16>
    %c0_1 = arith.constant 0 : index
    %c0_2 = arith.constant 0 : index
    %2 = vector.load %arg2[%c0_1, %c0_2] : memref<32x4xf32, #tpu.memory_space<vmem>>, vector<32x4xf32>
    %cst = arith.constant dense<0.000000e+00> : vector<16x4xf32>
    %3 = tpu.matmul %0, %2, %cst {dimension_numbers = #tpu.dot_dimension_numbers<[1], [0], [0], [1], [0, 0, 1, 1], [], []>} : vector<16x32xf32>, vector<32x4xf32>, vector<16x4xf32> -> vector<16x4xf32>
    %cst_3 = arith.constant dense<0xFF800000> : vector<16xf32>
    %4 = vector.multi_reduction <maximumf>, %3, %cst_3 [1] : vector<16x4xf32> to vector<16xf32>
    %5 = vector.shape_cast %4 : vector<16xf32> to vector<16x1xf32>
    %6 = vector.broadcast %5 : vector<16x1xf32> to vector<16x4xf32>
    %7 = arith.subf %3, %6 : vector<16x4xf32>
    %8 = math.exp %7 : vector<16x4xf32>
    %cst_4 = arith.constant dense<0.000000e+00> : vector<16xf32>
    %9 = vector.multi_reduction <add>, %8, %cst_4 [1] : vector<16x4xf32> to vector<16xf32>
    %10 = vector.shape_cast %9 : vector<16xf32> to vector<16x1xf32>
    %11 = tpu.reciprocal %10 {approx = true} : vector<16x1xf32> -> vector<16x1xf32>
    %12 = vector.broadcast %11 : vector<16x1xf32> to vector<16x4xf32>
    %13 = arith.mulf %8, %12 : vector<16x4xf32>
    %cst_5 = arith.constant 0.000000e+00 : f32
    %14 = vector.broadcast %cst_5 : f32 to vector<16x4xf32>
    %15 = vector.extract_strided_slice %13 {offsets = [0, 0], sizes = [16, 1], strides = [1, 1]} : vector<16x4xf32> to vector<16x1xf32>
    %16 = vector.broadcast %15 : vector<16x1xf32> to vector<16x4xf32>
    %17 = arith.cmpf ogt, %16, %13 : vector<16x4xf32>
    %18 = arith.extui %17 : vector<16x4xi1> to vector<16x4xi32>
    %19 = arith.sitofp %18 : vector<16x4xi32> to vector<16x4xf32>
    %20 = arith.addf %14, %19 : vector<16x4xf32>
    %21 = vector.extract_strided_slice %13 {offsets = [0, 1], sizes = [16, 1], strides = [1, 1]} : vector<16x4xf32> to vector<16x1xf32>
    %22 = vector.broadcast %21 : vector<16x1xf32> to vector<16x4xf32>
    %23 = arith.cmpf ogt, %22, %13 : vector<16x4xf32>
    %24 = arith.extui %23 : vector<16x4xi1> to vector<16x4xi32>
    %25 = arith.sitofp %24 : vector<16x4xi32> to vector<16x4xf32>
    %26 = arith.addf %20, %25 : vector<16x4xf32>
    %27 = vector.extract_strided_slice %13 {offsets = [0, 2], sizes = [16, 1], strides = [1, 1]} : vector<16x4xf32> to vector<16x1xf32>
    %28 = vector.broadcast %27 : vector<16x1xf32> to vector<16x4xf32>
    %29 = arith.cmpf ogt, %28, %13 : vector<16x4xf32>
    %30 = arith.extui %29 : vector<16x4xi1> to vector<16x4xi32>
    %31 = arith.sitofp %30 : vector<16x4xi32> to vector<16x4xf32>
    %32 = arith.addf %26, %31 : vector<16x4xf32>
    %33 = vector.extract_strided_slice %13 {offsets = [0, 3], sizes = [16, 1], strides = [1, 1]} : vector<16x4xf32> to vector<16x1xf32>
    %34 = vector.broadcast %33 : vector<16x1xf32> to vector<16x4xf32>
    %35 = arith.cmpf ogt, %34, %13 : vector<16x4xf32>
    %36 = arith.extui %35 : vector<16x4xi1> to vector<16x4xi32>
    %37 = arith.sitofp %36 : vector<16x4xi32> to vector<16x4xf32>
    %38 = arith.addf %32, %37 : vector<16x4xf32>
    %cst_6 = arith.constant 2.000000e+00 : f32
    %39 = vector.broadcast %cst_6 : f32 to vector<16x4xf32>
    %40 = arith.cmpf olt, %38, %39 : vector<16x4xf32>
    %cst_7 = arith.constant 0.000000e+00 : f32
    %41 = vector.broadcast %cst_7 : f32 to vector<16x4xf32>
    %42 = arith.select %40, %13, %41 : vector<16x4xi1>, vector<16x4xf32>
    %c0_8 = arith.constant 0 : index
    %c0_9 = arith.constant 0 : index
    %43 = vector.load %arg3[%c0_8, %c0_9] : memref<32x768xbf16, #tpu.memory_space<vmem>>, vector<32x768xbf16>
    %cst_10 = arith.constant dense<0.000000e+00> : vector<16x768xf32>
    %44 = tpu.matmul %1, %43, %cst_10 {dimension_numbers = #tpu.dot_dimension_numbers<[1], [0], [0], [1], [0, 0, 1, 1], [], []>} : vector<16x32xbf16>, vector<32x768xbf16>, vector<16x768xf32> -> vector<16x768xf32>
    %45 = vector.extract_strided_slice %44 {offsets = [0, 0], sizes = [16, 384], strides = [1, 1]} : vector<16x768xf32> to vector<16x384xf32>
    %46 = vector.extract_strided_slice %44 {offsets = [0, 384], sizes = [16, 384], strides = [1, 1]} : vector<16x768xf32> to vector<16x384xf32>
    %cst_11 = arith.constant 5.000000e-01 : f32
    %47 = vector.broadcast %cst_11 : f32 to vector<16x384xf32>
    %48 = arith.mulf %47, %45 : vector<16x384xf32>
    %49 = math.tanh %48 : vector<16x384xf32>
    %cst_12 = arith.constant 5.000000e-01 : f32
    %50 = vector.broadcast %cst_12 : f32 to vector<16x384xf32>
    %51 = arith.mulf %50, %49 : vector<16x384xf32>
    %cst_13 = arith.constant 5.000000e-01 : f32
    %52 = vector.broadcast %cst_13 : f32 to vector<16x384xf32>
    %53 = arith.addf %51, %52 : vector<16x384xf32>
    %54 = arith.mulf %45, %53 : vector<16x384xf32>
    %55 = arith.mulf %54, %46 : vector<16x384xf32>
    %56 = arith.truncf %42 : vector<16x4xf32> to vector<16x4xbf16>
    %c0_14 = arith.constant 0 : index
    %c0_15 = arith.constant 0 : index
    %57 = vector.load %arg4[%c0_14, %c0_15] : memref<4x384xbf16, #tpu.memory_space<vmem>>, vector<4x384xbf16>
    %cst_16 = arith.constant dense<0.000000e+00> : vector<16x384xf32>
    %58 = tpu.matmul %56, %57, %cst_16 {dimension_numbers = #tpu.dot_dimension_numbers<[1], [0], [0], [1], [0, 0, 1, 1], [], []>} : vector<16x4xbf16>, vector<4x384xbf16>, vector<16x384xf32> -> vector<16x384xf32>
    %c0_17 = arith.constant 0 : index
    %c0_18 = arith.constant 0 : index
    %59 = vector.load %arg5[%c0_17, %c0_18] : memref<1x384xf32, #tpu.memory_space<vmem>>, vector<1x384xf32>
    %60 = vector.broadcast %59 : vector<1x384xf32> to vector<16x384xf32>
    %61 = arith.addf %58, %60 : vector<16x384xf32>
    %62 = arith.mulf %55, %61 : vector<16x384xf32>
    %63 = arith.truncf %62 : vector<16x384xf32> to vector<16x384xbf16>
    %c0_19 = arith.constant 0 : index
    %c0_20 = arith.constant 0 : index
    %64 = vector.load %arg6[%c0_19, %c0_20] : memref<384x32xbf16, #tpu.memory_space<vmem>>, vector<384x32xbf16>
    %cst_21 = arith.constant dense<0.000000e+00> : vector<16x32xf32>
    %65 = tpu.matmul %63, %64, %cst_21 {dimension_numbers = #tpu.dot_dimension_numbers<[1], [0], [0], [1], [0, 0, 1, 1], [], []>} : vector<16x384xbf16>, vector<384x32xbf16>, vector<16x32xf32> -> vector<16x32xf32>
    %c0_22 = arith.constant 0 : index
    %c0_23 = arith.constant 0 : index
    %66 = vector.load %arg7[%c0_22, %c0_23] : memref<16x32xf32, #tpu.memory_space<vmem>>, vector<16x32xf32>
    tpu.vector_store %arg7[%c0_22, %c0_23], %65 {strides = array<i32>} : memref<16x32xf32, #tpu.memory_space<vmem>>, vector<16x32xf32>,
    return
  }
  func.func @transform_0(%arg0: i32) -> (i32, i32) {
    %c0_i32 = arith.constant 0 : i32
    %c0_i32_0 = arith.constant 0 : i32
    return %arg0, %c0_i32 : i32, i32
  }
  func.func @transform_1(%arg0: i32) -> (i32, i32) {
    %c0_i32 = arith.constant 0 : i32
    %c0_i32_0 = arith.constant 0 : i32
    %c0_i32_1 = arith.constant 0 : i32
    return %c0_i32, %c0_i32_0 : i32, i32
  }
  func.func @transform_2(%arg0: i32) -> (i32, i32) {
    %c0_i32 = arith.constant 0 : i32
    %c0_i32_0 = arith.constant 0 : i32
    %c0_i32_1 = arith.constant 0 : i32
    return %c0_i32, %c0_i32_0 : i32, i32
  }
  func.func @transform_3(%arg0: i32) -> (i32, i32) {
    %c0_i32 = arith.constant 0 : i32
    %c0_i32_0 = arith.constant 0 : i32
    %c0_i32_1 = arith.constant 0 : i32
    return %c0_i32, %c0_i32_0 : i32, i32
  }
  func.func @transform_4(%arg0: i32) -> (i32, i32) {
    %c0_i32 = arith.constant 0 : i32
    %c0_i32_0 = arith.constant 0 : i32
    %c0_i32_1 = arith.constant 0 : i32
    return %c0_i32, %c0_i32_0 : i32, i32
  }
  func.func @transform_5(%arg0: i32) -> (i32, i32) {
    %c0_i32 = arith.constant 0 : i32
    %c0_i32_0 = arith.constant 0 : i32
    %c0_i32_1 = arith.constant 0 : i32
    return %c0_i32, %c0_i32_0 : i32, i32
  }
  func.func @transform_6(%arg0: i32) -> (i32, i32) {
    %c0_i32 = arith.constant 0 : i32
    %c0_i32_0 = arith.constant 0 : i32
    return %arg0, %c0_i32 : i32, i32
  }
}

</mosaic_0001>

<llo_original>
// kernel: moe_forward.1
$region0: #{moe_forward.1}
  #allocation0 [shape = 'u32[]', space=smem, size = 0x4, offset = 0x4, fixed_abs, tag = 'smem constant byte address 0x4 - core index']
  #allocation1 [shape = 'u32[144,128]{1,0:T(1,128)}', space=vmem, size = 0x12000, scoped, tag = 'internal scratch']
  %s0 = inlined_call_operand.vmem [shape: f32[16,32], index: 0, kind: input, shape index: {}]
  %s1 = inlined_call_operand.vmem [shape: f32[32,4], index: 1, kind: input, shape index: {}]
  %s2 = inlined_call_operand.vmem [shape: bf16[32,768], index: 2, kind: input, shape index: {}]
  %s3 = inlined_call_operand.vmem [shape: bf16[4,384], index: 3, kind: input, shape index: {}]
  %s4 = inlined_call_operand.vmem [shape: f32[1,384], index: 4, kind: input, shape index: {}]
  %s5 = inlined_call_operand.vmem [shape: bf16[384,32], index: 5, kind: input, shape index: {}]
  %s6 = inlined_call_operand.hbm [shape: f32[16,32], index: 6, kind: output, shape index: {}]
  %s7 = sld [smem:[#allocation0]]
  $region34: #{moe_forward.1} parent=0
    _
  %s9 = ssub.s32 1, %s7
  %s10 = scalar_select 0, %s9, %s7
  $region1: #{moe_forward.1} parent=0
    #allocation2 [shape = 'u8[8192]{0}', space=vmem, size = 0x2000, scoped, tag = 'output window, operand 0, single buffered']
    #allocation3 [shape = 's32[1]{0}', space=sflag, size = 0x4, scoped, tag = 'scoped memory for moe_forward.1']
    %11 = vsyncpa [#allocation3], 0
    // Predicated region
    $region2: #{moe_forward.1} parent=1 // pred_check
      _
    $region3: #{moe_forward.1} parent=1 // pred_check_branch
      %13 = sbr.rel (0) target = $region5
    $region4: #{moe_forward.1} parent=1 // pred_region
      _
    $region5: #{moe_forward.1} parent=1 // pred_fallthru
      _
    // Predicated region
    $region6: #{moe_forward.1} parent=1 // pred_check
      _
    $region7: #{moe_forward.1} parent=1 // pred_check_branch
      %15 = sbr.rel (0) target = $region9
    $region8: #{moe_forward.1} parent=1 // pred_region
      _
    $region9: #{moe_forward.1} parent=1 // pred_fallthru
      _
    // Predicated region
    $region10: #{moe_forward.1} parent=1 // pred_check
      _
    $region11: #{moe_forward.1} parent=1 // pred_check_branch
      %17 = sbr.rel (0) target = $region13
    $region12: #{moe_forward.1} parent=1 // pred_region
      _
    $region13: #{moe_forward.1} parent=1 // pred_fallthru
      _
    // Predicated region
    $region14: #{moe_forward.1} parent=1 // pred_check
      _
    $region15: #{moe_forward.1} parent=1 // pred_check_branch
      %19 = sbr.rel (0) target = $region17
    $region16: #{moe_forward.1} parent=1 // pred_region
      _
    $region17: #{moe_forward.1} parent=1 // pred_fallthru
      _
    // Predicated region
    $region18: #{moe_forward.1} parent=1 // pred_check
      _
    $region19: #{moe_forward.1} parent=1 // pred_check_branch
      %21 = sbr.rel (0) target = $region21
    $region20: #{moe_forward.1} parent=1 // pred_region
      _
    $region21: #{moe_forward.1} parent=1 // pred_fallthru
      _
    // Predicated region
    $region22: #{moe_forward.1} parent=1 // pred_check
      _
    $region23: #{moe_forward.1} parent=1 // pred_check_branch
      %23 = sbr.rel (0) target = $region25
    $region24: #{moe_forward.1} parent=1 // pred_region
      _
    $region25: #{moe_forward.1} parent=1 // pred_fallthru
      _
    %v25 = vld [vmem:[%s0] sm:$0xff]
    %v26 = vld [vmem:[%s0 + $0x8] sm:$0xff]
    %v27 = vpack.c.bf16 %v26, %v25
    %v28 = vld [vmem:[%s1] sm:$0xff]
    %v29 = vld [vmem:[%s1 + $0x8] sm:$0xff]
    %v30 = vld [vmem:[%s1 + $0x10] sm:$0xff]
    %v31 = vld [vmem:[%s1 + $0x18] sm:$0xff]
    %vm32 = vcmask 261120
    %v34 = vsel %vm32, %v25, 0
    %v37 = vsel %vm32, %v26, 0
    %39 = vmatprep.subr.mxu0 0.0
    %40 = vmatpush1.msra.mxu0 %v28
    %41 = vmatprep.subr.mxu0 0.0
    %42 = vmatpush1.msra.mxu0 %v29
    %43 = vmatprep.subr.mxu0 0.0
    %44 = vmatpush1.msra.mxu0 %v30
    %45 = vmatprep.subr.mxu0 0.0
    %46 = vmatpush1.msra.mxu0 %v31
    %47 = vmatprep.subr.mxu0 0.0
    %48 = vmatpush1.msra.mxu0 0.0
    %49 = vmatprep.subr.mxu0 0.0
    %50 = vmatpush1.msra.mxu0 0.0
    %51 = vmatprep.subr.mxu0 0.0
    %52 = vmatpush1.msra.mxu0 0.0
    %53 = vmatprep.subr.mxu0 0.0
    %54 = vmatpush1.msra.mxu0 0.0
    %55 = vmatprep.subr.mxu0 0.0
    %56 = vmatpush1.msra.mxu0 0.0
    %57 = vmatprep.subr.mxu0 0.0
    %58 = vmatpush1.msra.mxu0 0.0
    %59 = vmatprep.subr.mxu0 0.0
    %60 = vmatpush1.msra.mxu0 0.0
    %61 = vmatprep.subr.mxu0 0.0
    %62 = vmatpush1.msra.mxu0 0.0
    %63 = vmatprep.subr.mxu0 0.0
    %64 = vmatpush1.msra.mxu0 0.0
    %65 = vmatprep.subr.mxu0 0.0
    %66 = vmatpush1.msra.mxu0 0.0
    %67 = vmatprep.subr.mxu0 0.0
    %68 = vmatpush1.msra.mxu0 0.0
    %69 = vmatprep.subr.mxu0 0.0
    %70 = vmatpush1.msra.mxu0 0.0
    %71 = vmatprep.subr.mxu0 0.0
    %72 = vmatpush1.msra.mxu0 0.0
    %73 = vmatprep.subr.mxu0 0.0
    %74 = vmatpush1.msra.mxu0 0.0
    %75 = vmatprep.subr.mxu0 0.0
    %76 = vmatpush1.msra.mxu0 0.0
    %77 = vmatprep.subr.mxu0 0.0
    %78 = vmatpush1.msra.mxu0 0.0
    %79 = vmatprep.subr.mxu0 0.0
    %80 = vmatpush1.msra.mxu0 0.0
    %81 = vmatprep.subr.mxu0 0.0
    %82 = vmatpush1.msra.mxu0 0.0
    %83 = vmatprep.subr.mxu0 0.0
    %84 = vmatpush1.msra.mxu0 0.0
    %85 = vmatprep.subr.mxu0 0.0
    %86 = vmatpush1.msra.mxu0 0.0
    %87 = vmatprep.subr.mxu0 0.0
    %88 = vmatpush1.msra.mxu0 0.0
    %89 = vmatprep.subr.mxu0 0.0
    %90 = vmatpush1.msra.mxu0 0.0
    %91 = vmatprep.subr.mxu0 0.0
    %92 = vmatpush1.msra.mxu0 0.0
    %93 = vmatprep.subr.mxu0 0.0
    %94 = vmatpush1.msra.mxu0 0.0
    %95 = vmatprep.subr.mxu0 0.0
    %96 = vmatpush1.msra.mxu0 0.0
    %97 = vmatprep.subr.mxu0 0.0
    %98 = vmatpush1.msra.mxu0 0.0
    %99 = vmatprep.subr.mxu0 0.0
    %100 = vmatpush1.msra.mxu0 0.0
    %101 = vmatprep.subr.mxu0 0.0
    %102 = vmatpush1.msra.mxu0 0.0
    %103 = vmatprep.mubr.f32.mxu0 0.0
    %104 = vmatmul.mubr.f32.gmra.mrb[0].mxu0 %v34
    %v105 = vpop.f32.mrb[0].mxu0
    %v106 = vadd.f32 0.0, %v105
    %v107 = vpop.f32.mrb[0].mxu0
    %108 = vmatprep.mubr.f32.mxu0 0.0
    %109 = vmatmul.mubr.f32.gmra.mrb[0].mxu0 %v37
    %v110 = vpop.f32.mrb[0].mxu0
    %v111 = vadd.f32 0.0, %v110
    %v112 = vpop.f32.mrb[0].mxu0
    %113 = vdwg.mxu0
    %vm114 = vcmask 31744
    %v115 = vsel %vm114, %v106, -inf
    %116 = vmax.xlane.f32.xlu0 %v115
    %v117 = vpop.xlane.xlu0 %116
    %v118 = vsel %vm114, %v111, -inf
    %119 = vmax.xlane.f32.xlu0 %v118
    %v120 = vpop.xlane.xlu0 %119
    %v121 = vsub.f32 %v106, %v117
    %v122 = vsub.f32 %v111, %v120
    %v123 = vmul.f32 %v121, 1.442695
    %v124 = vpow.pop %v123
    %v125 = vmul.f32 %v122, 1.442695
    %v126 = vpow.pop %v125
    %v127 = vsel %vm114, %v124, 0.0
    %128 = vadd.xlane.f32.xlu0 %v127
    %v129 = vpop.xlane.xlu0 %128
    %v130 = vsel %vm114, %v126, 0.0
    %131 = vadd.xlane.f32.xlu0 %v130
    %v132 = vpop.xlane.xlu0 %131
    %v133 = vrcp.pop %v129
    %v134 = vrcp.pop %v132
    %v135 = vmul.f32 %v124, %v133
    %v136 = vmul.f32 %v126, %v134
    %138 = vset.pattern.permute.xlu0 0
    %139 = vperm.xlu0 %138, %v135
    %v140 = vpop.permute.xlu0 %139
    %143 = vset.pattern.permute.xlu0 0
    %144 = vperm.xlu0 %143, %v136
    %v145 = vpop.permute.xlu0 %144
    %vm147 = vcmp.gt.f32.partialorder %v140, %v135
    %vm148 = vcmp.gt.f32.partialorder %v145, %v136
    %v149 = vsel %vm147, 1, 0
    %v150 = vsel %vm148, 1, 0
    %v151 = vcvt.s32.f32 %v149
    %v152 = vcvt.s32.f32 %v150
    %v153 = vadd.f32 %v151, 0.0
    %v154 = vadd.f32 %v152, 0.0
    %155 = vset.pattern.permute.xlu0 1
    %156 = vperm.xlu0 %155, %v135
    %v157 = vpop.permute.xlu0 %156
    %159 = vset.pattern.permute.xlu0 1
    %160 = vperm.xlu0 %159, %v136
    %v161 = vpop.permute.xlu0 %160
    %vm163 = vcmp.gt.f32.partialorder %v157, %v135
    %vm164 = vcmp.gt.f32.partialorder %v161, %v136
    %v165 = vsel %vm163, 1, 0
    %v166 = vsel %vm164, 1, 0
    %v167 = vcvt.s32.f32 %v165
    %v168 = vcvt.s32.f32 %v166
    %v169 = vadd.f32 %v153, %v167
    %v170 = vadd.f32 %v154, %v168
    %171 = vset.pattern.permute.xlu0 2
    %172 = vperm.xlu0 %171, %v135
    %v173 = vpop.permute.xlu0 %172
    %175 = vset.pattern.permute.xlu0 2
    %176 = vperm.xlu0 %175, %v136
    %v177 = vpop.permute.xlu0 %176
    %vm179 = vcmp.gt.f32.partialorder %v173, %v135
    %vm180 = vcmp.gt.f32.partialorder %v177, %v136
    %v181 = vsel %vm179, 1, 0
    %v182 = vsel %vm180, 1, 0
    %v183 = vcvt.s32.f32 %v181
    %v184 = vcvt.s32.f32 %v182
    %v185 = vadd.f32 %v169, %v183
    %v186 = vadd.f32 %v170, %v184
    %187 = vset.pattern.permute.xlu0 3
    %188 = vperm.xlu0 %187, %v135
    %v189 = vpop.permute.xlu0 %188
    %191 = vset.pattern.permute.xlu0 3
    %192 = vperm.xlu0 %191, %v136
    %v193 = vpop.permute.xlu0 %192
    %vm195 = vcmp.gt.f32.partialorder %v189, %v135
    %vm196 = vcmp.gt.f32.partialorder %v193, %v136
    %v197 = vsel %vm195, 1, 0
    %v198 = vsel %vm196, 1, 0
    %v199 = vcvt.s32.f32 %v197
    %v200 = vcvt.s32.f32 %v198
    %v201 = vadd.f32 %v185, %v199
    %v202 = vadd.f32 %v186, %v200
    %vm203 = vcmp.lt.f32.partialorder %v201, 2.0
    %vm204 = vcmp.lt.f32.partialorder %v202, 2.0
    %v205 = vsel %vm203, %v135, 0.0
    %v206 = vsel %vm204, %v136, 0.0
    %v207 = vld [vmem:[%s2] sm:$0xff]
    %v208 = vld [vmem:[%s2 + $0x8] sm:$0xff]
    %v209 = vld [vmem:[%s2 + $0x10] sm:$0xff]
    %v210 = vld [vmem:[%s2 + $0x18] sm:$0xff]
    %v211 = vld [vmem:[%s2 + $0x20] sm:$0xff]
    %v212 = vld [vmem:[%s2 + $0x28] sm:$0xff]
    %v213 = vld [vmem:[%s2 + $0x30] sm:$0xff]
    %v214 = vld [vmem:[%s2 + $0x38] sm:$0xff]
    %v215 = vld [vmem:[%s2 + $0x40] sm:$0xff]
    %v216 = vld [vmem:[%s2 + $0x48] sm:$0xff]
    %v217 = vld [vmem:[%s2 + $0x50] sm:$0xff]
    %v218 = vld [vmem:[%s2 + $0x58] sm:$0xff]
    %v231 = vunpack.c.l.b16 %v207
    %v232 = vunpack.c.h.b16 %v207
    %v233 = vunpack.c.l.b16 %v208
    %v234 = vunpack.c.h.b16 %v208
    %v235 = vunpack.c.l.b16 %v209
    %v236 = vunpack.c.h.b16 %v209
    %v237 = vunpack.c.l.b16 %v210
    %v238 = vunpack.c.h.b16 %v210
    %v239 = vunpack.c.l.b16 %v211
    %v240 = vunpack.c.h.b16 %v211
    %v241 = vunpack.c.l.b16 %v212
    %v242 = vunpack.c.h.b16 %v212
    %v243 = vunpack.c.l.b16 %v213
    %v244 = vunpack.c.h.b16 %v213
    %v245 = vunpack.c.l.b16 %v214
    %v246 = vunpack.c.h.b16 %v214
    %v247 = vunpack.c.l.b16 %v215
    %v248 = vunpack.c.h.b16 %v215
    %v249 = vunpack.c.l.b16 %v216
    %v250 = vunpack.c.h.b16 %v216
    %v251 = vunpack.c.l.b16 %v217
    %v252 = vunpack.c.h.b16 %v217
    %v253 = vunpack.c.l.b16 %v218
    %v254 = vunpack.c.h.b16 %v218
    %v255 = vpack.c.b16 %v237, %v231
    %v256 = vpack.c.b16 %v238, %v232
    %v257 = vpack.c.b16 %v239, %v233
    %v258 = vpack.c.b16 %v240, %v234
    %v259 = vpack.c.b16 %v241, %v235
    %v260 = vpack.c.b16 %v242, %v236
    %v261 = vpack.c.b16 %v249, %v243
    %v262 = vpack.c.b16 %v250, %v244
    %v263 = vpack.c.b16 %v251, %v245
    %v264 = vpack.c.b16 %v252, %v246
    %v265 = vpack.c.b16 %v253, %v247
    %v266 = vpack.c.b16 %v254, %v248
    %v280 = vsel %vm32, %v27, 0
    %282 = vmatprep.subr.bf16.mxu0 %v256
    %283 = vmatpush1.bf16.msra.mxu0 %v255
    %284 = vmatprep.subr.bf16.mxu0 %v262
    %285 = vmatpush1.bf16.msra.mxu0 %v261
    %286 = vmatprep.subr.bf16.mxu0 0
    %287 = vmatpush1.bf16.msra.mxu0 0
    %288 = vmatprep.subr.bf16.mxu0 0
    %289 = vmatpush1.bf16.msra.mxu0 0
    %290 = vmatprep.subr.bf16.mxu0 0
    %291 = vmatpush1.bf16.msra.mxu0 0
    %292 = vmatprep.subr.bf16.mxu0 0
    %293 = vmatpush1.bf16.msra.mxu0 0
    %294 = vmatprep.subr.bf16.mxu0 0
    %295 = vmatpush1.bf16.msra.mxu0 0
    %296 = vmatprep.subr.bf16.mxu0 0
    %297 = vmatpush1.bf16.msra.mxu0 0
    %298 = vmatprep.subr.bf16.mxu0 0
    %299 = vmatpush1.bf16.msra.mxu0 0
    %300 = vmatprep.subr.bf16.mxu0 0
    %301 = vmatpush1.bf16.msra.mxu0 0
    %302 = vmatprep.subr.bf16.mxu0 0
    %303 = vmatpush1.bf16.msra.mxu0 0
    %304 = vmatprep.subr.bf16.mxu0 0
    %305 = vmatpush1.bf16.msra.mxu0 0
    %306 = vmatprep.subr.bf16.mxu0 0
    %307 = vmatpush1.bf16.msra.mxu0 0
    %308 = vmatprep.subr.bf16.mxu0 0
    %309 = vmatpush1.bf16.msra.mxu0 0
    %310 = vmatprep.subr.bf16.mxu0 0
    %311 = vmatpush1.bf16.msra.mxu0 0
    %312 = vmatprep.subr.bf16.mxu0 0
    %313 = vmatpush1.bf16.msra.mxu0 0
    %314 = vmatprep.mubr.bf16.mxu0 0
    %315 = vmatmul.mubr.bf16.gmra.mrb[0].mxu0 %v280
    %v316 = vpop.f32.mrb[0].mxu0
    %v317 = vadd.f32 0.0, %v316
    %v318 = vpop.f32.mrb[0].mxu0
    %v319 = vadd.f32 0.0, %v318
    %v320 = vpop.f32.mrb[0].mxu0
    %v321 = vadd.f32 0.0, %v320
    %v322 = vpop.f32.mrb[0].mxu0
    %v323 = vadd.f32 0.0, %v322
    %324 = vdwg.mxu0
    %325 = vmatprep.subr.bf16.mxu0 %v258
    %326 = vmatpush1.bf16.msra.mxu0 %v257
    %327 = vmatprep.subr.bf16.mxu0 %v264
    %328 = vmatpush1.bf16.msra.mxu0 %v263
    %329 = vmatprep.subr.bf16.mxu0 0
    %330 = vmatpush1.bf16.msra.mxu0 0
    %331 = vmatprep.subr.bf16.mxu0 0
    %332 = vmatpush1.bf16.msra.mxu0 0
    %333 = vmatprep.subr.bf16.mxu0 0
    %334 = vmatpush1.bf16.msra.mxu0 0
    %335 = vmatprep.subr.bf16.mxu0 0
    %336 = vmatpush1.bf16.msra.mxu0 0
    %337 = vmatprep.subr.bf16.mxu0 0
    %338 = vmatpush1.bf16.msra.mxu0 0
    %339 = vmatprep.subr.bf16.mxu0 0
    %340 = vmatpush1.bf16.msra.mxu0 0
    %341 = vmatprep.subr.bf16.mxu0 0
    %342 = vmatpush1.bf16.msra.mxu0 0
    %343 = vmatprep.subr.bf16.mxu0 0
    %344 = vmatpush1.bf16.msra.mxu0 0
    %345 = vmatprep.subr.bf16.mxu0 0
    %346 = vmatpush1.bf16.msra.mxu0 0
    %347 = vmatprep.subr.bf16.mxu0 0
    %348 = vmatpush1.bf16.msra.mxu0 0
    %349 = vmatprep.subr.bf16.mxu0 0
    %350 = vmatpush1.bf16.msra.mxu0 0
    %351 = vmatprep.subr.bf16.mxu0 0
    %352 = vmatpush1.bf16.msra.mxu0 0
    %353 = vmatprep.subr.bf16.mxu0 0
    %354 = vmatpush1.bf16.msra.mxu0 0
    %355 = vmatprep.subr.bf16.mxu0 0
    %356 = vmatpush1.bf16.msra.mxu0 0
    %357 = vmatprep.mubr.bf16.mxu0 0
    %358 = vmatmul.mubr.bf16.gmra.mrb[0].mxu0 %v280
    %v359 = vpop.f32.mrb[0].mxu0
    %v360 = vadd.f32 0.0, %v359
    %v361 = vpop.f32.mrb[0].mxu0
    %v362 = vadd.f32 0.0, %v361
    %v363 = vpop.f32.mrb[0].mxu0
    %v364 = vadd.f32 0.0, %v363
    %v365 = vpop.f32.mrb[0].mxu0
    %v366 = vadd.f32 0.0, %v365
    %367 = vdwg.mxu0
    %368 = vmatprep.subr.bf16.mxu0 %v260
    %369 = vmatpush1.bf16.msra.mxu0 %v259
    %370 = vmatprep.subr.bf16.mxu0 %v266
    %371 = vmatpush1.bf16.msra.mxu0 %v265
    %372 = vmatprep.subr.bf16.mxu0 0
    %373 = vmatpush1.bf16.msra.mxu0 0
    %374 = vmatprep.subr.bf16.mxu0 0
    %375 = vmatpush1.bf16.msra.mxu0 0
    %376 = vmatprep.subr.bf16.mxu0 0
    %377 = vmatpush1.bf16.msra.mxu0 0
    %378 = vmatprep.subr.bf16.mxu0 0
    %379 = vmatpush1.bf16.msra.mxu0 0
    %380 = vmatprep.subr.bf16.mxu0 0
    %381 = vmatpush1.bf16.msra.mxu0 0
    %382 = vmatprep.subr.bf16.mxu0 0
    %383 = vmatpush1.bf16.msra.mxu0 0
    %384 = vmatprep.subr.bf16.mxu0 0
    %385 = vmatpush1.bf16.msra.mxu0 0
    %386 = vmatprep.subr.bf16.mxu0 0
    %387 = vmatpush1.bf16.msra.mxu0 0
    %388 = vmatprep.subr.bf16.mxu0 0
    %389 = vmatpush1.bf16.msra.mxu0 0
    %390 = vmatprep.subr.bf16.mxu0 0
    %391 = vmatpush1.bf16.msra.mxu0 0
    %392 = vmatprep.subr.bf16.mxu0 0
    %393 = vmatpush1.bf16.msra.mxu0 0
    %394 = vmatprep.subr.bf16.mxu0 0
    %395 = vmatpush1.bf16.msra.mxu0 0
    %396 = vmatprep.subr.bf16.mxu0 0
    %397 = vmatpush1.bf16.msra.mxu0 0
    %398 = vmatprep.subr.bf16.mxu0 0
    %399 = vmatpush1.bf16.msra.mxu0 0
    %400 = vmatprep.mubr.bf16.mxu0 0
    %401 = vmatmul.mubr.bf16.gmra.mrb[0].mxu0 %v280
    %v402 = vpop.f32.mrb[0].mxu0
    %v403 = vadd.f32 0.0, %v402
    %v404 = vpop.f32.mrb[0].mxu0
    %v405 = vadd.f32 0.0, %v404
    %v406 = vpop.f32.mrb[0].mxu0
    %v407 = vadd.f32 0.0, %v406
    %v408 = vpop.f32.mrb[0].mxu0
    %v409 = vadd.f32 0.0, %v408
    %410 = vdwg.mxu0
    %v411 = vmul.f32 %v317, 0.5
    %v412 = vmul.f32 %v319, 0.5
    %v413 = vmul.f32 %v360, 0.5
    %v414 = vmul.f32 %v321, 0.5
    %v415 = vmul.f32 %v323, 0.5
    %v416 = vmul.f32 %v364, 0.5
    %v417 = vtanh.pop %v411
    %v418 = vtanh.pop %v412
    %v419 = vtanh.pop %v413
    %v420 = vtanh.pop %v414
    %v421 = vtanh.pop %v415
    %v422 = vtanh.pop %v416
    %v423 = vmul.f32 %v417, 0.5
    %v424 = vmul.f32 %v418, 0.5
    %v425 = vmul.f32 %v419, 0.5
    %v426 = vmul.f32 %v420, 0.5
    %v427 = vmul.f32 %v421, 0.5
    %v428 = vmul.f32 %v422, 0.5
    %v429 = vadd.f32 %v423, 0.5
    %v430 = vadd.f32 %v424, 0.5
    %v431 = vadd.f32 %v425, 0.5
    %v432 = vadd.f32 %v426, 0.5
    %v433 = vadd.f32 %v427, 0.5
    %v434 = vadd.f32 %v428, 0.5
    %v435 = vmul.f32 %v317, %v429
    %v436 = vmul.f32 %v319, %v430
    %v437 = vmul.f32 %v360, %v431
    %v438 = vmul.f32 %v321, %v432
    %v439 = vmul.f32 %v323, %v433
    %v440 = vmul.f32 %v364, %v434
    %v441 = vmul.f32 %v435, %v362
    %v442 = vmul.f32 %v436, %v403
    %v443 = vmul.f32 %v437, %v405
    %v444 = vmul.f32 %v438, %v366
    %v445 = vmul.f32 %v439, %v407
    %v446 = vmul.f32 %v440, %v409
    %v447 = vpack.c.bf16 %v206, %v205
    %v448 = vld [vmem:[%s3] sm:$0x3f]
    %v449 = vld [vmem:[%s4] sm:$0x7]
    %v451 = vlaneseq
    %v452 = vshrl.u32 %v451, 7
    %v453 = vsub.s32 0, %v452
    %v454 = vrot.slane %v449, %v453
    %v455 = vlaneseq
    %v456 = vshrl.u32 %v455, 7
    %v457 = vsub.s32 1, %v456
    %v458 = vrot.slane %v449, %v457
    %v459 = vlaneseq
    %v460 = vshrl.u32 %v459, 7
    %v461 = vsub.s32 2, %v460
    %v462 = vrot.slane %v449, %v461
    %v467 = vcombine.high %v448, %v448
    %v469 = vunpack.c.l.s4 1983009808
    %v470 = vunpack.c.0.s8 %v469
    %v471 = vlaneseq
    %v472 = vshrl.u32 %v471, 7
    %v473 = vsub.s32 %v470, %v472
    %v474 = vrot.slane %v448, %v473
    %v476 = vunpack.c.l.s4 1983009808
    %v477 = vunpack.c.0.s8 %v476
    %v478 = vlaneseq
    %v479 = vshrl.u32 %v478, 7
    %v480 = vsub.s32 %v477, %v479
    %v481 = vrot.slane %v467, %v480
    %v482 = vcombine.high %v474, %v474
    %v484 = vsel %vm114, %v447, 0
    %vm486 = vcmask 1041408
    %v488 = vsel %vm486, %v474, 0
    %v491 = vsel %vm486, %v482, 0
    %v494 = vsel %vm486, %v481, 0
    %496 = vmatprep.subr.bf16.mxu0 %v491
    %497 = vmatpush1.bf16.msra.mxu0 %v488
    %498 = vmatprep.subr.bf16.mxu0 0
    %499 = vmatpush1.bf16.msra.mxu0 0
    %500 = vmatprep.subr.bf16.mxu0 0
    %501 = vmatpush1.bf16.msra.mxu0 0
    %502 = vmatprep.subr.bf16.mxu0 0
    %503 = vmatpush1.bf16.msra.mxu0 0
    %504 = vmatprep.subr.bf16.mxu0 0
    %505 = vmatpush1.bf16.msra.mxu0 0
    %506 = vmatprep.subr.bf16.mxu0 0
    %507 = vmatpush1.bf16.msra.mxu0 0
    %508 = vmatprep.subr.bf16.mxu0 0
    %509 = vmatpush1.bf16.msra.mxu0 0
    %510 = vmatprep.subr.bf16.mxu0 0
    %511 = vmatpush1.bf16.msra.mxu0 0
    %512 = vmatprep.subr.bf16.mxu0 0
    %513 = vmatpush1.bf16.msra.mxu0 0
    %514 = vmatprep.subr.bf16.mxu0 0
    %515 = vmatpush1.bf16.msra.mxu0 0
    %516 = vmatprep.subr.bf16.mxu0 0
    %517 = vmatpush1.bf16.msra.mxu0 0
    %518 = vmatprep.subr.bf16.mxu0 0
    %519 = vmatpush1.bf16.msra.mxu0 0
    %520 = vmatprep.subr.bf16.mxu0 0
    %521 = vmatpush1.bf16.msra.mxu0 0
    %522 = vmatprep.subr.bf16.mxu0 0
    %523 = vmatpush1.bf16.msra.mxu0 0
    %524 = vmatprep.subr.bf16.mxu0 0
    %525 = vmatpush1.bf16.msra.mxu0 0
    %526 = vmatprep.subr.bf16.mxu0 0
    %527 = vmatpush1.bf16.msra.mxu0 0
    %528 = vmatprep.mubr.bf16.mxu0 0
    %529 = vmatmul.mubr.bf16.gmra.mrb[0].mxu0 %v484
    %v530 = vpop.f32.mrb[0].mxu0
    %v531 = vadd.f32 %v454, %v530
    %v532 = vpop.f32.mrb[0].mxu0
    %v533 = vadd.f32 %v458, %v532
    %v534 = vpop.f32.mrb[0].mxu0
    %v535 = vadd.f32 %v454, %v534
    %v536 = vpop.f32.mrb[0].mxu0
    %v537 = vadd.f32 %v458, %v536
    %538 = vdwg.mxu0
    %539 = vmatprep.subr.bf16.mxu0 0
    %540 = vmatpush1.bf16.msra.mxu0 %v494
    %541 = vmatprep.subr.bf16.mxu0 0
    %542 = vmatpush1.bf16.msra.mxu0 0
    %543 = vmatprep.subr.bf16.mxu0 0
    %544 = vmatpush1.bf16.msra.mxu0 0
    %545 = vmatprep.subr.bf16.mxu0 0
    %546 = vmatpush1.bf16.msra.mxu0 0
    %547 = vmatprep.subr.bf16.mxu0 0
    %548 = vmatpush1.bf16.msra.mxu0 0
    %549 = vmatprep.subr.bf16.mxu0 0
    %550 = vmatpush1.bf16.msra.mxu0 0
    %551 = vmatprep.subr.bf16.mxu0 0
    %552 = vmatpush1.bf16.msra.mxu0 0
    %553 = vmatprep.subr.bf16.mxu0 0
    %554 = vmatpush1.bf16.msra.mxu0 0
    %555 = vmatprep.subr.bf16.mxu0 0
    %556 = vmatpush1.bf16.msra.mxu0 0
    %557 = vmatprep.subr.bf16.mxu0 0
    %558 = vmatpush1.bf16.msra.mxu0 0
    %559 = vmatprep.subr.bf16.mxu0 0
    %560 = vmatpush1.bf16.msra.mxu0 0
    %561 = vmatprep.subr.bf16.mxu0 0
    %562 = vmatpush1.bf16.msra.mxu0 0
    %563 = vmatprep.subr.bf16.mxu0 0
    %564 = vmatpush1.bf16.msra.mxu0 0
    %565 = vmatprep.subr.bf16.mxu0 0
    %566 = vmatpush1.bf16.msra.mxu0 0
    %567 = vmatprep.subr.bf16.mxu0 0
    %568 = vmatpush1.bf16.msra.mxu0 0
    %569 = vmatprep.subr.bf16.mxu0 0
    %570 = vmatpush1.bf16.msra.mxu0 0
    %571 = vmatprep.mubr.bf16.mxu0 0
    %572 = vmatmul.mubr.bf16.gmra.mrb[0].mxu0 %v484
    %v573 = vpop.f32.mrb[0].mxu0
    %v574 = vadd.f32 %v462, %v573
    %v575 = vpop.f32.mrb[0].mxu0
    %v576 = vpop.f32.mrb[0].mxu0
    %v577 = vadd.f32 %v462, %v576
    %v578 = vpop.f32.mrb[0].mxu0
    %579 = vdwg.mxu0
    %v580 = vmul.f32 %v441, %v531
    %v581 = vmul.f32 %v442, %v533
    %v582 = vmul.f32 %v443, %v574
    %v583 = vmul.f32 %v444, %v535
    %v584 = vmul.f32 %v445, %v537
    %v585 = vmul.f32 %v446, %v577
    %v586 = vpack.c.bf16 %v583, %v580
    %v587 = vpack.c.bf16 %v584, %v581
    %v588 = vpack.c.bf16 %v585, %v582
    %v589 = vld [vmem:[%s5] sm:$0xf]
    %v590 = vld [vmem:[%s5 + $0x4] sm:$0xf]
    %v591 = vld [vmem:[%s5 + $0x8] sm:$0xf]
    %v592 = vld [vmem:[%s5 + $0xc] sm:$0xf]
    %v593 = vld [vmem:[%s5 + $0x10] sm:$0xf]
    %v594 = vld [vmem:[%s5 + $0x14] sm:$0xf]
    %v595 = vld [vmem:[%s5 + $0x18] sm:$0xf]
    %v596 = vld [vmem:[%s5 + $0x1c] sm:$0xf]
    %v597 = vld [vmem:[%s5 + $0x20] sm:$0xf]
    %v598 = vld [vmem:[%s5 + $0x24] sm:$0xf]
    %v599 = vld [vmem:[%s5 + $0x28] sm:$0xf]
    %v600 = vld [vmem:[%s5 + $0x2c] sm:$0xf]
    %v601 = vld [vmem:[%s5 + $0x30] sm:$0xf]
    %v602 = vld [vmem:[%s5 + $0x34] sm:$0xf]
    %v603 = vld [vmem:[%s5 + $0x38] sm:$0xf]
    %v604 = vld [vmem:[%s5 + $0x3c] sm:$0xf]
    %v605 = vld [vmem:[%s5 + $0x40] sm:$0xf]
    %v606 = vld [vmem:[%s5 + $0x44] sm:$0xf]
    %v607 = vld [vmem:[%s5 + $0x48] sm:$0xf]
    %v608 = vld [vmem:[%s5 + $0x4c] sm:$0xf]
    %v609 = vld [vmem:[%s5 + $0x50] sm:$0xf]
    %v610 = vld [vmem:[%s5 + $0x54] sm:$0xf]
    %v611 = vld [vmem:[%s5 + $0x58] sm:$0xf]
    %v612 = vld [vmem:[%s5 + $0x5c] sm:$0xf]
    %v613 = vld [vmem:[%s5 + $0x60] sm:$0xf]
    %v614 = vld [vmem:[%s5 + $0x64] sm:$0xf]
    %v615 = vld [vmem:[%s5 + $0x68] sm:$0xf]
    %v616 = vld [vmem:[%s5 + $0x6c] sm:$0xf]
    %v617 = vld [vmem:[%s5 + $0x70] sm:$0xf]
    %v618 = vld [vmem:[%s5 + $0x74] sm:$0xf]
    %v619 = vld [vmem:[%s5 + $0x78] sm:$0xf]
    %v620 = vld [vmem:[%s5 + $0x7c] sm:$0xf]
    %v621 = vld [vmem:[%s5 + $0x80] sm:$0xf]
    %v622 = vld [vmem:[%s5 + $0x84] sm:$0xf]
    %v623 = vld [vmem:[%s5 + $0x88] sm:$0xf]
    %v624 = vld [vmem:[%s5 + $0x8c] sm:$0xf]
    %v625 = vld [vmem:[%s5 + $0x90] sm:$0xf]
    %v626 = vld [vmem:[%s5 + $0x94] sm:$0xf]
    %v627 = vld [vmem:[%s5 + $0x98] sm:$0xf]
    %v628 = vld [vmem:[%s5 + $0x9c] sm:$0xf]
    %v629 = vld [vmem:[%s5 + $0xa0] sm:$0xf]
    %v630 = vld [vmem:[%s5 + $0xa4] sm:$0xf]
    %v631 = vld [vmem:[%s5 + $0xa8] sm:$0xf]
    %v632 = vld [vmem:[%s5 + $0xac] sm:$0xf]
    %v633 = vld [vmem:[%s5 + $0xb0] sm:$0xf]
    %v634 = vld [vmem:[%s5 + $0xb4] sm:$0xf]
    %v635 = vld [vmem:[%s5 + $0xb8] sm:$0xf]
    %v636 = vld [vmem:[%s5 + $0xbc] sm:$0xf]
    %v685 = vunpack.c.l.b16 %v589
    %v686 = vunpack.c.l.b16 %v590
    %v687 = vunpack.c.l.b16 %v591
    %v688 = vunpack.c.l.b16 %v592
    %v689 = vunpack.c.l.b16 %v593
    %v690 = vunpack.c.l.b16 %v594
    %v691 = vunpack.c.l.b16 %v595
    %v692 = vunpack.c.l.b16 %v596
    %v693 = vunpack.c.l.b16 %v597
    %v694 = vunpack.c.l.b16 %v598
    %v695 = vunpack.c.l.b16 %v599
    %v696 = vunpack.c.l.b16 %v600
    %v697 = vunpack.c.l.b16 %v601
    %v698 = vunpack.c.l.b16 %v602
    %v699 = vunpack.c.l.b16 %v603
    %v700 = vunpack.c.l.b16 %v604
    %v701 = vunpack.c.l.b16 %v605
    %v702 = vunpack.c.l.b16 %v606
    %v703 = vunpack.c.l.b16 %v607
    %v704 = vunpack.c.l.b16 %v608
    %v705 = vunpack.c.l.b16 %v609
    %v706 = vunpack.c.l.b16 %v610
    %v707 = vunpack.c.l.b16 %v611
    %v708 = vunpack.c.l.b16 %v612
    %v709 = vunpack.c.l.b16 %v613
    %v710 = vunpack.c.l.b16 %v614
    %v711 = vunpack.c.l.b16 %v615
    %v712 = vunpack.c.l.b16 %v616
    %v713 = vunpack.c.l.b16 %v617
    %v714 = vunpack.c.l.b16 %v618
    %v715 = vunpack.c.l.b16 %v619
    %v716 = vunpack.c.l.b16 %v620
    %v717 = vunpack.c.l.b16 %v621
    %v718 = vunpack.c.l.b16 %v622
    %v719 = vunpack.c.l.b16 %v623
    %v720 = vunpack.c.l.b16 %v624
    %v721 = vunpack.c.l.b16 %v625
    %v722 = vunpack.c.l.b16 %v626
    %v723 = vunpack.c.l.b16 %v627
    %v724 = vunpack.c.l.b16 %v628
    %v725 = vunpack.c.l.b16 %v629
    %v726 = vunpack.c.l.b16 %v630
    %v727 = vunpack.c.l.b16 %v631
    %v728 = vunpack.c.l.b16 %v632
    %v729 = vunpack.c.l.b16 %v633
    %v730 = vunpack.c.l.b16 %v634
    %v731 = vunpack.c.l.b16 %v635
    %v732 = vunpack.c.l.b16 %v636
    %v733 = vpack.c.b16 %v686, %v685
    %v734 = vpack.c.b16 %v688, %v687
    %v735 = vpack.c.b16 %v690, %v689
    %v736 = vpack.c.b16 %v692, %v691
    %v737 = vpack.c.b16 %v694, %v693
    %v738 = vpack.c.b16 %v696, %v695
    %v739 = vpack.c.b16 %v698, %v697
    %v740 = vpack.c.b16 %v700, %v699
    %v741 = vpack.c.b16 %v702, %v701
    %v742 = vpack.c.b16 %v704, %v703
    %v743 = vpack.c.b16 %v706, %v705
    %v744 = vpack.c.b16 %v708, %v707
    %v745 = vpack.c.b16 %v710, %v709
    %v746 = vpack.c.b16 %v712, %v711
    %v747 = vpack.c.b16 %v714, %v713
    %v748 = vpack.c.b16 %v716, %v715
    %v749 = vpack.c.b16 %v718, %v717
    %v750 = vpack.c.b16 %v720, %v719
    %v751 = vpack.c.b16 %v722, %v721
    %v752 = vpack.c.b16 %v724, %v723
    %v753 = vpack.c.b16 %v726, %v725
    %v754 = vpack.c.b16 %v728, %v727
    %v755 = vpack.c.b16 %v730, %v729
    %v756 = vpack.c.b16 %v732, %v731
    %781 = vmatprep.subr.bf16.mxu0 0
    %782 = vmatpush1.bf16.msra.mxu0 %v733
    %783 = vmatprep.subr.bf16.mxu0 0
    %784 = vmatpush1.bf16.msra.mxu0 %v734
    %785 = vmatprep.subr.bf16.mxu0 0
    %786 = vmatpush1.bf16.msra.mxu0 %v735
    %787 = vmatprep.subr.bf16.mxu0 0
    %788 = vmatpush1.bf16.msra.mxu0 %v736
    %789 = vmatprep.subr.bf16.mxu0 0
    %790 = vmatpush1.bf16.msra.mxu0 %v737
    %791 = vmatprep.subr.bf16.mxu0 0
    %792 = vmatpush1.bf16.msra.mxu0 %v738
    %793 = vmatprep.subr.bf16.mxu0 0
    %794 = vmatpush1.bf16.msra.mxu0 %v739
    %795 = vmatprep.subr.bf16.mxu0 0
    %796 = vmatpush1.bf16.msra.mxu0 %v740
    %797 = vmatprep.subr.bf16.mxu0 0
    %798 = vmatpush1.bf16.msra.mxu0 %v741
    %799 = vmatprep.subr.bf16.mxu0 0
    %800 = vmatpush1.bf16.msra.mxu0 %v742
    %801 = vmatprep.subr.bf16.mxu0 0
    %802 = vmatpush1.bf16.msra.mxu0 %v743
    %803 = vmatprep.subr.bf16.mxu0 0
    %804 = vmatpush1.bf16.msra.mxu0 %v744
    %805 = vmatprep.subr.bf16.mxu0 0
    %806 = vmatpush1.bf16.msra.mxu0 %v745
    %807 = vmatprep.subr.bf16.mxu0 0
    %808 = vmatpush1.bf16.msra.mxu0 %v746
    %809 = vmatprep.subr.bf16.mxu0 0
    %810 = vmatpush1.bf16.msra.mxu0 %v747
    %811 = vmatprep.subr.bf16.mxu0 0
    %812 = vmatpush1.bf16.msra.mxu0 %v748
    %813 = vmatprep.mubr.bf16.mxu0 %v587
    %814 = vmatmul.mubr.bf16.gmra.mrb[0].mxu0 %v586
    %v815 = vpop.f32.mrb[0].mxu0
    %v816 = vadd.f32 0.0, %v815
    %v817 = vpop.f32.mrb[0].mxu0
    %v818 = vpop.f32.mrb[0].mxu0
    %v819 = vadd.f32 0.0, %v818
    %v820 = vpop.f32.mrb[0].mxu0
    %821 = vdwg.mxu0
    %822 = vmatprep.subr.bf16.mxu0 0
    %823 = vmatpush1.bf16.msra.mxu0 %v749
    %824 = vmatprep.subr.bf16.mxu0 0
    %825 = vmatpush1.bf16.msra.mxu0 %v750
    %826 = vmatprep.subr.bf16.mxu0 0
    %827 = vmatpush1.bf16.msra.mxu0 %v751
    %828 = vmatprep.subr.bf16.mxu0 0
    %829 = vmatpush1.bf16.msra.mxu0 %v752
    %830 = vmatprep.subr.bf16.mxu0 0
    %831 = vmatpush1.bf16.msra.mxu0 %v753
    %832 = vmatprep.subr.bf16.mxu0 0
    %833 = vmatpush1.bf16.msra.mxu0 %v754
    %834 = vmatprep.subr.bf16.mxu0 0
    %835 = vmatpush1.bf16.msra.mxu0 %v755
    %836 = vmatprep.subr.bf16.mxu0 0
    %837 = vmatpush1.bf16.msra.mxu0 %v756
    %838 = vmatprep.subr.bf16.mxu0 0
    %839 = vmatpush1.bf16.msra.mxu0 0
    %840 = vmatprep.subr.bf16.mxu0 0
    %841 = vmatpush1.bf16.msra.mxu0 0
    %842 = vmatprep.subr.bf16.mxu0 0
    %843 = vmatpush1.bf16.msra.mxu0 0
    %844 = vmatprep.subr.bf16.mxu0 0
    %845 = vmatpush1.bf16.msra.mxu0 0
    %846 = vmatprep.subr.bf16.mxu0 0
    %847 = vmatpush1.bf16.msra.mxu0 0
    %848 = vmatprep.subr.bf16.mxu0 0
    %849 = vmatpush1.bf16.msra.mxu0 0
    %850 = vmatprep.subr.bf16.mxu0 0
    %851 = vmatpush1.bf16.msra.mxu0 0
    %852 = vmatprep.subr.bf16.mxu0 0
    %853 = vmatpush1.bf16.msra.mxu0 0
    %854 = vmatprep.mubr.bf16.mxu0 0
    %855 = vmatmul.mubr.bf16.gmra.mrb[0].mxu0 %v588
    %v856 = vpop.f32.mrb[0].mxu0
    %v857 = vadd.f32 %v816, %v856
    %v858 = vpop.f32.mrb[0].mxu0
    %v859 = vpop.f32.mrb[0].mxu0
    %v860 = vadd.f32 %v819, %v859
    %v861 = vpop.f32.mrb[0].mxu0
    %862 = vdwg.mxu0
    %863 = vst.msk [vmem:[#allocation2] sm:$0xff] %vm32, %v857
    %864 = vst.msk [vmem:[#allocation2 + $0x8] sm:$0xff] %vm32, %v860
    // Predicated region
    $region26: #{moe_forward.1} parent=1 // pred_check
      _
    $region27: #{moe_forward.1} parent=1 // pred_check_branch
      %866 = sbr.rel (0) target = $region29
    $region28: #{moe_forward.1} parent=1 // pred_region
      %s868 = ssub.s32 256, 256
      %869 = vsyncadd [#allocation3], %s868
      %s870 = sshll.u32 [#allocation2], 4
      %s871 = int_to_ptr.vmem [resolvable:$true] %s870
      %876 = dma.vmem_to_hbm [thread:$0]  %s871, 256, %s6, [#allocation3], 128, 128, 8
    $region29: #{moe_forward.1} parent=1 // pred_fallthru
      _
    // Predicated region
    $region30: #{moe_forward.1} parent=1 // pred_check
      _
    $region31: #{moe_forward.1} parent=1 // pred_check_branch
      %878 = sbr.rel (0) target = $region33
    $region32: #{moe_forward.1} parent=1 // pred_region
      %879 = dma.done [#allocation3], 256
    $region33: #{moe_forward.1} parent=1 // pred_fallthru
      _
    %880 = vsyncpa [#allocation3], 1

</llo_original>
